<compile_context>
chip_gen: v7x
topology: tpu7x:2x2x1
jax: 0.10.0
libtpu: 0.0.40
codegen_flags: <defaults>
</compile_context>

<pallas_src>
import functools

import jax
import jax.numpy as jnp
from jax.experimental import pallas as pl
from jax.experimental.pallas import tpu as pltpu

LANE = 128
_MIN_ROWS_PER_CORE = 256   # only split across 2 TCs (v7x) when each gets >= this many rows


def _round_up(n, m):
    return ((n + m - 1) // m) * m


def _pad2d(a, rows, cols):
    r, c = a.shape
    return jnp.pad(a, ((0, rows - r), (0, cols - c)))


def _tensorcores_per_chip():
    """2 on v7x (2 TCs/chip), else 1. Purely a trace-time heuristic."""
    try:
        kind = jax.devices()[0].device_kind.lower()
    except Exception:
        return 1
    return 2 if "v7" in kind else 1


def solar_kernel(x_ref,        # (block_b, n_features)  f32 (cast to bf16 in kernel)
                 w1_ref,       # (n_features, nH_p)     bf16
                 wmid_ref,     # (4, nH_p, nH_p)        bf16  [w2t, w3t, w4t, w5t]
                 w6_ref,       # (nH_p, n_horizon)      bf16
                 bh_ref,       # (5, nH_p)              f32   [b1..b5]
                 b6_ref,       # (1, n_horizon)         f32
                 o_ref):       # (block_b, n_horizon)   f32
    f32, bf16 = jnp.float32, jnp.bfloat16

    x = x_ref[...].astype(bf16)                 # fused cast (no wrapper pad/cast pass)
    bh = bh_ref[...]                            # (5, nH_p) f32
    b1, b2, b3, b4, b5 = (bh[k:k + 1] for k in range(5))

    # ---- mlp1: relu(linear1) -> linear2 ----
    h = jnp.maximum(
        jnp.dot(x, w1_ref[...], preferred_element_type=f32) + b1, 0.0
    ).astype(bf16)
    x1 = jnp.dot(h, wmid_ref[0], preferred_element_type=f32) + b2          # f32

    # ---- mlp2 (SkipMLP): relu(linear1) -> linear2 + residual ----
    h = jnp.maximum(
        jnp.dot(x1.astype(bf16), wmid_ref[1], preferred_element_type=f32) + b3, 0.0
    ).astype(bf16)
    x2 = jnp.dot(h, wmid_ref[2], preferred_element_type=f32) + b4 + x1     # f32 residual

    # ---- mlp3: relu(linear1) -> linear2 ----
    h = jnp.maximum(
        jnp.dot(x2.astype(bf16), wmid_ref[3], preferred_element_type=f32) + b5, 0.0
    ).astype(bf16)
    x3 = jnp.dot(h, w6_ref[...], preferred_element_type=f32) + b6_ref[...]

    # ---- clamp_min(0); narrow (n_horizon-wide) store -> 16x less HBM writeback ----
    o_ref[...] = jnp.maximum(x3, 0.0).astype(o_ref.dtype)


@functools.partial(jax.jit, static_argnames=("block_b_max",))
def solar_forward(features, params, *, block_b_max=1024):
    """features: (B, n_features) f32; params: dict of transposed f32 weights/biases."""
    B, n_features = features.shape
    n_hidden = params["w1t"].shape[1]
    n_horizon = params["w6t"].shape[1]

    nH_p = _round_up(n_hidden, LANE)
    bf16 = jnp.bfloat16

    # --- grid: 1 step unless the batch is large; only split for 2 TCs on v7x ---
    n_tc = _tensorcores_per_chip()
    grid_n = max(1, pl.cdiv(B, block_b_max))
    if n_tc >= 2 and B >= n_tc * _MIN_ROWS_PER_CORE:
        grid_n = max(grid_n, n_tc)
    block_b = _round_up(pl.cdiv(B, grid_n), 16)      # bf16-tile-aligned sublanes
    B_pad = grid_n * block_b

    # --- inputs: only the batch dim is (rarely) padded; feature dim stays unpadded f32 ---
    x = features if B_pad == B else jnp.pad(features, ((0, B_pad - B), (0, 0)))

    # --- weights: pad hidden dims to 128 lanes, stack the square ones, cast to bf16 once ---
    # TODO(synk): in a real deployment pre-pack/pad these once outside the per-call path.
    w1t = _pad2d(params["w1t"], n_features, nH_p).astype(bf16)             # (nF, nH_p)
    wmid = jnp.stack(
        [_pad2d(params[k], nH_p, nH_p) for k in ("w2t", "w3t", "w4t", "w5t")]
    ).astype(bf16)                                                         # (4, nH_p, nH_p)
    w6t = _pad2d(params["w6t"], nH_p, n_horizon).astype(bf16)              # (nH_p, nO)
    bh = jnp.concatenate(
        [_pad2d(params[k], 1, nH_p) for k in ("b1", "b2", "b3", "b4", "b5")], axis=0
    ).astype(jnp.float32)                                                  # (5, nH_p)
    b6 = params["b6"].astype(jnp.float32)                                  # (1, nO)

    in_specs = [
        pl.BlockSpec((block_b, n_features), lambda i: (i, 0)),     # x (f32, unpadded lanes)
        pl.BlockSpec((n_features, nH_p), lambda i: (0, 0)),        # w1t
        pl.BlockSpec((4, nH_p, nH_p), lambda i: (0, 0, 0)),        # stacked hidden weights
        pl.BlockSpec((nH_p, n_horizon), lambda i: (0, 0)),         # w6t (unpadded out dim)
        pl.BlockSpec((5, nH_p), lambda i: (0, 0)),                 # stacked hidden biases
        pl.BlockSpec((1, n_horizon), lambda i: (0, 0)),            # b6
    ]
    out_spec = pl.BlockSpec((block_b, n_horizon), lambda i: (i, 0))

    out_p = pl.pallas_call(
        solar_kernel,
        out_shape=jax.ShapeDtypeStruct((B_pad, n_horizon), jnp.float32),
        grid=(grid_n,),
        in_specs=in_specs,
        out_specs=out_spec,
        compiler_params=pltpu.CompilerParams(
            dimension_semantics=("parallel",)),
    )(x, w1t, wmid, w6t, bh, b6)

    return out_p if B_pad == B else out_p[:B]


def init_params(key, n_features, n_hidden, n_horizon):
    """Deterministic synthetic init, shapes matching nn.Linear (stored transposed, f32)."""
    def linear(k, n_in, n_out):
        kw, kb = jax.random.split(k)
        bound = 1.0 / jnp.sqrt(n_in)
        w = jax.random.uniform(kw, (n_out, n_in), jnp.float32, -bound, bound)
        b = jax.random.uniform(kb, (n_out,), jnp.float32, -bound, bound)
        return w.T, b.reshape(1, n_out)   # store (in, out) and (1, out)

    ks = jax.random.split(key, 6)
    w1t, b1 = linear(ks[0], n_features, n_hidden)   # mlp1.linear1
    w2t, b2 = linear(ks[1], n_hidden,   n_hidden)   # mlp1.linear2
    w3t, b3 = linear(ks[2], n_hidden,   n_hidden)   # mlp2.linear1
    w4t, b4 = linear(ks[3], n_hidden,   n_hidden)   # mlp2.linear2
    w5t, b5 = linear(ks[4], n_hidden,   n_hidden)   # mlp3.linear1
    w6t, b6 = linear(ks[5], n_hidden,   n_horizon)  # mlp3.linear2
    return dict(w1t=w1t, b1=b1, w2t=w2t, b2=b2, w3t=w3t, b3=b3,
                w4t=w4t, b4=b4, w5t=w5t, b5=b5, w6t=w6t, b6=b6)


def solar_reference_f32(features, p):
    relu = lambda v: jnp.maximum(v, 0.0)
    x1 = relu(features @ p["w1t"] + p["b1"]) @ p["w2t"] + p["b2"]
    x2 = relu(x1 @ p["w3t"] + p["b3"]) @ p["w4t"] + p["b4"] + x1
    x3 = relu(x2 @ p["w5t"] + p["b5"]) @ p["w6t"] + p["b6"]
    return jnp.maximum(x3, 0.0)


def solar_reference_bf16(features, p):
    """Mirrors the kernel's precision: bf16 operands, f32 accumulation / residual."""
    bf = jnp.bfloat16
    f32 = jnp.float32
    dot = lambda a, b: jnp.dot(a.astype(bf), b.astype(bf), preferred_element_type=f32)
    relu = lambda v: jnp.maximum(v, 0.0)
    x1 = dot(relu(dot(features, p["w1t"]) + p["b1"]), p["w2t"]) + p["b2"]
    x2 = dot(relu(dot(x1, p["w3t"]) + p["b3"]), p["w4t"]) + p["b4"] + x1
    x3 = dot(relu(dot(x2, p["w5t"]) + p["b5"]), p["w6t"]) + p["b6"]
    return jnp.maximum(x3, 0.0)


if __name__ == "__main__":
    # Small shapes consistent with the module: features (B, n_features)
    B, n_features, n_hidden, n_horizon = 16, 32, 64, 8

    key = jax.random.PRNGKey(0)
    k_x, k_p = jax.random.split(key)
    features = jax.random.normal(k_x, (B, n_features), jnp.float32)
    params = init_params(k_p, n_features, n_hidden, n_horizon)

    out = solar_forward(features, params)
    out = jax.block_until_ready(out)
    assert out.shape == (B, n_horizon)

    # Tight check vs. a reference with matching (bf16 operand / f32 accum) precision.
    ref_bf16 = solar_reference_bf16(features, params)
    assert jnp.allclose(out, ref_bf16, atol=1e-4, rtol=1e-4), "mismatch vs bf16-precision reference"

    # Loose sanity check vs. the full-f32 PyTorch-equivalent reference (intentional
    # bf16 precision trade on the MXU operands).
    ref_f32 = solar_reference_f32(features, params)
    assert jnp.allclose(out, ref_f32, atol=5e-2, rtol=5e-2), "mismatch vs f32 reference"

    print("KERNEL_OK")
</pallas_src>

<mosaic_0001>
module attributes {stable_mosaic.version = 11 : i64} {
  func.func @solar_kernel(%arg0: i32, %arg1: memref<16x32xf32, #tpu.memory_space<vmem>>, %arg2: memref<32x128xbf16, #tpu.memory_space<vmem>>, %arg3: memref<4x128x128xbf16, #tpu.memory_space<vmem>>, %arg4: memref<128x8xbf16, #tpu.memory_space<vmem>>, %arg5: memref<5x128xf32, #tpu.memory_space<vmem>>, %arg6: memref<1x8xf32, #tpu.memory_space<vmem>>, %arg7: memref<16x8xf32, #tpu.memory_space<vmem>>) attributes {dimension_semantics = [#tpu.dimension_semantics<parallel>], iteration_bounds = array<i64: 1>, scalar_prefetch = 0 : i64, scratch_operands = 0 : i64, tpu.core_type = #tpu.core_type<tc>, window_params = [{transform_indices = @transform_0, window_bounds = array<i64: 16, 32>}, {pipeline_mode = #tpu.pipeline_mode<synchronous>, transform_indices = @transform_1, window_bounds = array<i64: 32, 128>}, {pipeline_mode = #tpu.pipeline_mode<synchronous>, transform_indices = @transform_2, window_bounds = array<i64: 4, 128, 128>}, {pipeline_mode = #tpu.pipeline_mode<synchronous>, transform_indices = @transform_3, window_bounds = array<i64: 128, 8>}, {pipeline_mode = #tpu.pipeline_mode<synchronous>, transform_indices = @transform_4, window_bounds = array<i64: 5, 128>}, {pipeline_mode = #tpu.pipeline_mode<synchronous>, transform_indices = @transform_5, window_bounds = array<i64: 1, 8>}, {transform_indices = @transform_6, window_bounds = array<i64: 16, 8>}]} {
    %c0 = arith.constant 0 : index
    %c0_0 = arith.constant 0 : index
    %0 = vector.load %arg1[%c0, %c0_0] : memref<16x32xf32, #tpu.memory_space<vmem>>, vector<16x32xf32>
    %1 = arith.truncf %0 : vector<16x32xf32> to vector<16x32xbf16>
    %c0_1 = arith.constant 0 : index
    %c0_2 = arith.constant 0 : index
    %2 = vector.load %arg5[%c0_1, %c0_2] : memref<5x128xf32, #tpu.memory_space<vmem>>, vector<5x128xf32>
    %3 = vector.extract_strided_slice %2 {offsets = [0, 0], sizes = [1, 128], strides = [1, 1]} : vector<5x128xf32> to vector<1x128xf32>
    %4 = vector.extract_strided_slice %2 {offsets = [1, 0], sizes = [1, 128], strides = [1, 1]} : vector<5x128xf32> to vector<1x128xf32>
    %5 = vector.extract_strided_slice %2 {offsets = [2, 0], sizes = [1, 128], strides = [1, 1]} : vector<5x128xf32> to vector<1x128xf32>
    %6 = vector.extract_strided_slice %2 {offsets = [3, 0], sizes = [1, 128], strides = [1, 1]} : vector<5x128xf32> to vector<1x128xf32>
    %7 = vector.extract_strided_slice %2 {offsets = [4, 0], sizes = [1, 128], strides = [1, 1]} : vector<5x128xf32> to vector<1x128xf32>
    %c0_3 = arith.constant 0 : index
    %c0_4 = arith.constant 0 : index
    %8 = vector.load %arg2[%c0_3, %c0_4] : memref<32x128xbf16, #tpu.memory_space<vmem>>, vector<32x128xbf16>
    %cst = arith.constant dense<0.000000e+00> : vector<16x128xf32>
    %9 = tpu.matmul %1, %8, %cst {dimension_numbers = #tpu.dot_dimension_numbers<[1], [0], [0], [1], [0, 0, 1, 1], [], []>} : vector<16x32xbf16>, vector<32x128xbf16>, vector<16x128xf32> -> vector<16x128xf32>
    %10 = vector.broadcast %3 : vector<1x128xf32> to vector<16x128xf32>
    %11 = arith.addf %9, %10 : vector<16x128xf32>
    %cst_5 = arith.constant 0.000000e+00 : f32
    %12 = vector.broadcast %cst_5 : f32 to vector<16x128xf32>
    %13 = arith.maximumf %11, %12 : vector<16x128xf32>
    %14 = arith.truncf %13 : vector<16x128xf32> to vector<16x128xbf16>
    %c0_6 = arith.constant 0 : index
    %c0_7 = arith.constant 0 : index
    %c0_8 = arith.constant 0 : index
    %15 = vector.load %arg3[%c0_6, %c0_7, %c0_8] : memref<4x128x128xbf16, #tpu.memory_space<vmem>>, vector<1x128x128xbf16>
    %16 = vector.shape_cast %15 : vector<1x128x128xbf16> to vector<128x128xbf16>
    %cst_9 = arith.constant dense<0.000000e+00> : vector<16x128xf32>
    %17 = tpu.matmul %14, %16, %cst_9 {dimension_numbers = #tpu.dot_dimension_numbers<[1], [0], [0], [1], [0, 0, 1, 1], [], []>} : vector<16x128xbf16>, vector<128x128xbf16>, vector<16x128xf32> -> vector<16x128xf32>
    %18 = vector.broadcast %4 : vector<1x128xf32> to vector<16x128xf32>
    %19 = arith.addf %17, %18 : vector<16x128xf32>
    %20 = arith.truncf %19 : vector<16x128xf32> to vector<16x128xbf16>
    %c1 = arith.constant 1 : index
    %c0_10 = arith.constant 0 : index
    %c0_11 = arith.constant 0 : index
    %21 = vector.load %arg3[%c1, %c0_10, %c0_11] : memref<4x128x128xbf16, #tpu.memory_space<vmem>>, vector<1x128x128xbf16>
    %22 = vector.shape_cast %21 : vector<1x128x128xbf16> to vector<128x128xbf16>
    %cst_12 = arith.constant dense<0.000000e+00> : vector<16x128xf32>
    %23 = tpu.matmul %20, %22, %cst_12 {dimension_numbers = #tpu.dot_dimension_numbers<[1], [0], [0], [1], [0, 0, 1, 1], [], []>} : vector<16x128xbf16>, vector<128x128xbf16>, vector<16x128xf32> -> vector<16x128xf32>
    %24 = vector.broadcast %5 : vector<1x128xf32> to vector<16x128xf32>
    %25 = arith.addf %23, %24 : vector<16x128xf32>
    %cst_13 = arith.constant 0.000000e+00 : f32
    %26 = vector.broadcast %cst_13 : f32 to vector<16x128xf32>
    %27 = arith.maximumf %25, %26 : vector<16x128xf32>
    %28 = arith.truncf %27 : vector<16x128xf32> to vector<16x128xbf16>
    %c2 = arith.constant 2 : index
    %c0_14 = arith.constant 0 : index
    %c0_15 = arith.constant 0 : index
    %29 = vector.load %arg3[%c2, %c0_14, %c0_15] : memref<4x128x128xbf16, #tpu.memory_space<vmem>>, vector<1x128x128xbf16>
    %30 = vector.shape_cast %29 : vector<1x128x128xbf16> to vector<128x128xbf16>
    %cst_16 = arith.constant dense<0.000000e+00> : vector<16x128xf32>
    %31 = tpu.matmul %28, %30, %cst_16 {dimension_numbers = #tpu.dot_dimension_numbers<[1], [0], [0], [1], [0, 0, 1, 1], [], []>} : vector<16x128xbf16>, vector<128x128xbf16>, vector<16x128xf32> -> vector<16x128xf32>
    %32 = vector.broadcast %6 : vector<1x128xf32> to vector<16x128xf32>
    %33 = arith.addf %31, %32 : vector<16x128xf32>
    %34 = arith.addf %33, %19 : vector<16x128xf32>
    %35 = arith.truncf %34 : vector<16x128xf32> to vector<16x128xbf16>
    %c3 = arith.constant 3 : index
    %c0_17 = arith.constant 0 : index
    %c0_18 = arith.constant 0 : index
    %36 = vector.load %arg3[%c3, %c0_17, %c0_18] : memref<4x128x128xbf16, #tpu.memory_space<vmem>>, vector<1x128x128xbf16>
    %37 = vector.shape_cast %36 : vector<1x128x128xbf16> to vector<128x128xbf16>
    %cst_19 = arith.constant dense<0.000000e+00> : vector<16x128xf32>
    %38 = tpu.matmul %35, %37, %cst_19 {dimension_numbers = #tpu.dot_dimension_numbers<[1], [0], [0], [1], [0, 0, 1, 1], [], []>} : vector<16x128xbf16>, vector<128x128xbf16>, vector<16x128xf32> -> vector<16x128xf32>
    %39 = vector.broadcast %7 : vector<1x128xf32> to vector<16x128xf32>
    %40 = arith.addf %38, %39 : vector<16x128xf32>
    %cst_20 = arith.constant 0.000000e+00 : f32
    %41 = vector.broadcast %cst_20 : f32 to vector<16x128xf32>
    %42 = arith.maximumf %40, %41 : vector<16x128xf32>
    %43 = arith.truncf %42 : vector<16x128xf32> to vector<16x128xbf16>
    %c0_21 = arith.constant 0 : index
    %c0_22 = arith.constant 0 : index
    %44 = vector.load %arg4[%c0_21, %c0_22] : memref<128x8xbf16, #tpu.memory_space<vmem>>, vector<128x8xbf16>
    %cst_23 = arith.constant dense<0.000000e+00> : vector<16x8xf32>
    %45 = tpu.matmul %43, %44, %cst_23 {dimension_numbers = #tpu.dot_dimension_numbers<[1], [0], [0], [1], [0, 0, 1, 1], [], []>} : vector<16x128xbf16>, vector<128x8xbf16>, vector<16x8xf32> -> vector<16x8xf32>
    %c0_24 = arith.constant 0 : index
    %c0_25 = arith.constant 0 : index
    %46 = vector.load %arg6[%c0_24, %c0_25] : memref<1x8xf32, #tpu.memory_space<vmem>>, vector<1x8xf32>
    %47 = vector.broadcast %46 : vector<1x8xf32> to vector<16x8xf32>
    %48 = arith.addf %45, %47 : vector<16x8xf32>
    %cst_26 = arith.constant 0.000000e+00 : f32
    %49 = vector.broadcast %cst_26 : f32 to vector<16x8xf32>
    %50 = arith.maximumf %48, %49 : vector<16x8xf32>
    %c0_27 = arith.constant 0 : index
    %c0_28 = arith.constant 0 : index
    %51 = vector.load %arg7[%c0_27, %c0_28] : memref<16x8xf32, #tpu.memory_space<vmem>>, vector<16x8xf32>
    tpu.vector_store %arg7[%c0_27, %c0_28], %50 {strides = array<i32>} : memref<16x8xf32, #tpu.memory_space<vmem>>, vector<16x8xf32>,
    return
  }
  func.func @transform_0(%arg0: i32) -> (i32, i32) {
    %c0_i32 = arith.constant 0 : i32
    %c0_i32_0 = arith.constant 0 : i32
    return %arg0, %c0_i32 : i32, i32
  }
  func.func @transform_1(%arg0: i32) -> (i32, i32) {
    %c0_i32 = arith.constant 0 : i32
    %c0_i32_0 = arith.constant 0 : i32
    %c0_i32_1 = arith.constant 0 : i32
    return %c0_i32, %c0_i32_0 : i32, i32
  }
  func.func @transform_2(%arg0: i32) -> (i32, i32, i32) {
    %c0_i32 = arith.constant 0 : i32
    %c0_i32_0 = arith.constant 0 : i32
    %c0_i32_1 = arith.constant 0 : i32
    %c0_i32_2 = arith.constant 0 : i32
    return %c0_i32, %c0_i32_0, %c0_i32_1 : i32, i32, i32
  }
  func.func @transform_3(%arg0: i32) -> (i32, i32) {
    %c0_i32 = arith.constant 0 : i32
    %c0_i32_0 = arith.constant 0 : i32
    %c0_i32_1 = arith.constant 0 : i32
    return %c0_i32, %c0_i32_0 : i32, i32
  }
  func.func @transform_4(%arg0: i32) -> (i32, i32) {
    %c0_i32 = arith.constant 0 : i32
    %c0_i32_0 = arith.constant 0 : i32
    %c0_i32_1 = arith.constant 0 : i32
    return %c0_i32, %c0_i32_0 : i32, i32
  }
  func.func @transform_5(%arg0: i32) -> (i32, i32) {
    %c0_i32 = arith.constant 0 : i32
    %c0_i32_0 = arith.constant 0 : i32
    %c0_i32_1 = arith.constant 0 : i32
    return %c0_i32, %c0_i32_0 : i32, i32
  }
  func.func @transform_6(%arg0: i32) -> (i32, i32) {
    %c0_i32 = arith.constant 0 : i32
    %c0_i32_0 = arith.constant 0 : i32
    return %arg0, %c0_i32 : i32, i32
  }
}

</mosaic_0001>

<llo_original>
// kernel: solar_forward.1
$region0: #{solar_forward.1}
  #allocation0 [shape = 'u32[]', space=smem, size = 0x4, offset = 0x4, fixed_abs, tag = 'smem constant byte address 0x4 - core index']
  #allocation1 [shape = 'u32[144,128]{1,0:T(1,128)}', space=vmem, size = 0x12000, scoped, tag = 'internal scratch']
  %s0 = inlined_call_operand.vmem [shape: f32[16,32], index: 0, kind: input, shape index: {}]
  %s1 = inlined_call_operand.vmem [shape: bf16[32,128], index: 1, kind: input, shape index: {}]
  %s2 = inlined_call_operand.vmem [shape: bf16[4,128,128], index: 2, kind: input, shape index: {}]
  %s3 = inlined_call_operand.vmem [shape: bf16[128,8], index: 3, kind: input, shape index: {}]
  %s4 = inlined_call_operand.vmem [shape: f32[5,128], index: 4, kind: input, shape index: {}]
  %s5 = inlined_call_operand.vmem [shape: f32[1,8], index: 5, kind: input, shape index: {}]
  %s6 = inlined_call_operand.vmem [shape: f32[16,8], index: 6, kind: output, shape index: {}]
  %s7 = sld [smem:[#allocation0]]
  $region34: #{solar_forward.1} parent=0
    _
  %s9 = ssub.s32 1, %s7
  %s10 = scalar_select 0, %s9, %s7
  // Predicated region
  $region2: #{solar_forward.1} parent=0 // pred_check
    _
  $region3: #{solar_forward.1} parent=0 // pred_check_branch
    %12 = sbr.rel (0) target = $region5
  $region4: #{solar_forward.1} parent=0 // pred_region
    _
  $region5: #{solar_forward.1} parent=0 // pred_fallthru
    _
  // Predicated region
  $region6: #{solar_forward.1} parent=0 // pred_check
    _
  $region7: #{solar_forward.1} parent=0 // pred_check_branch
    %14 = sbr.rel (0) target = $region9
  $region8: #{solar_forward.1} parent=0 // pred_region
    _
  $region9: #{solar_forward.1} parent=0 // pred_fallthru
    _
  // Predicated region
  $region10: #{solar_forward.1} parent=0 // pred_check
    _
  $region11: #{solar_forward.1} parent=0 // pred_check_branch
    %16 = sbr.rel (0) target = $region13
  $region12: #{solar_forward.1} parent=0 // pred_region
    _
  $region13: #{solar_forward.1} parent=0 // pred_fallthru
    _
  // Predicated region
  $region14: #{solar_forward.1} parent=0 // pred_check
    _
  $region15: #{solar_forward.1} parent=0 // pred_check_branch
    %18 = sbr.rel (0) target = $region17
  $region16: #{solar_forward.1} parent=0 // pred_region
    _
  $region17: #{solar_forward.1} parent=0 // pred_fallthru
    _
  // Predicated region
  $region18: #{solar_forward.1} parent=0 // pred_check
    _
  $region19: #{solar_forward.1} parent=0 // pred_check_branch
    %20 = sbr.rel (0) target = $region21
  $region20: #{solar_forward.1} parent=0 // pred_region
    _
  $region21: #{solar_forward.1} parent=0 // pred_fallthru
    _
  // Predicated region
  $region22: #{solar_forward.1} parent=0 // pred_check
    _
  $region23: #{solar_forward.1} parent=0 // pred_check_branch
    %22 = sbr.rel (0) target = $region25
  $region24: #{solar_forward.1} parent=0 // pred_region
    _
  $region25: #{solar_forward.1} parent=0 // pred_fallthru
    _
  %v24 = vld [vmem:[%s0] sm:$0xff]
  %v25 = vld [vmem:[%s0 + $0x8] sm:$0xff]
  %v26 = vpack.c.bf16 %v25, %v24
  %v27 = vld [vmem:[%s4] sm:$0x1f]
  %v28 = vld [vmem:[%s1] sm:$0xf]
  %v29 = vld [vmem:[%s1 + $0x4] sm:$0xf]
  %v30 = vld [vmem:[%s1 + $0x8] sm:$0xf]
  %v31 = vld [vmem:[%s1 + $0xc] sm:$0xf]
  %v32 = vlaneseq
  %v33 = vshrl.u32 %v32, 7
  %v34 = vsub.s32 0, %v33
  %v35 = vrot.slane %v27, %v34
  %v40 = vunpack.c.l.b16 %v28
  %v41 = vunpack.c.l.b16 %v29
  %v42 = vunpack.c.l.b16 %v30
  %v43 = vunpack.c.l.b16 %v31
  %v44 = vpack.c.b16 %v41, %v40
  %v45 = vpack.c.b16 %v43, %v42
  %vm48 = vcmask 261120
  %v50 = vsel %vm48, %v26, 0
  %52 = vmatprep.subr.bf16.mxu0 0
  %53 = vmatpush1.bf16.msra.mxu0 %v44
  %54 = vmatprep.subr.bf16.mxu0 0
  %55 = vmatpush1.bf16.msra.mxu0 %v45
  %56 = vmatprep.subr.bf16.mxu0 0
  %57 = vmatpush1.bf16.msra.mxu0 0
  %58 = vmatprep.subr.bf16.mxu0 0
  %59 = vmatpush1.bf16.msra.mxu0 0
  %60 = vmatprep.subr.bf16.mxu0 0
  %61 = vmatpush1.bf16.msra.mxu0 0
  %62 = vmatprep.subr.bf16.mxu0 0
  %63 = vmatpush1.bf16.msra.mxu0 0
  %64 = vmatprep.subr.bf16.mxu0 0
  %65 = vmatpush1.bf16.msra.mxu0 0
  %66 = vmatprep.subr.bf16.mxu0 0
  %67 = vmatpush1.bf16.msra.mxu0 0
  %68 = vmatprep.subr.bf16.mxu0 0
  %69 = vmatpush1.bf16.msra.mxu0 0
  %70 = vmatprep.subr.bf16.mxu0 0
  %71 = vmatpush1.bf16.msra.mxu0 0
  %72 = vmatprep.subr.bf16.mxu0 0
  %73 = vmatpush1.bf16.msra.mxu0 0
  %74 = vmatprep.subr.bf16.mxu0 0
  %75 = vmatpush1.bf16.msra.mxu0 0
  %76 = vmatprep.subr.bf16.mxu0 0
  %77 = vmatpush1.bf16.msra.mxu0 0
  %78 = vmatprep.subr.bf16.mxu0 0
  %79 = vmatpush1.bf16.msra.mxu0 0
  %80 = vmatprep.subr.bf16.mxu0 0
  %81 = vmatpush1.bf16.msra.mxu0 0
  %82 = vmatprep.subr.bf16.mxu0 0
  %83 = vmatpush1.bf16.msra.mxu0 0
  %84 = vmatprep.mubr.bf16.mxu0 0
  %85 = vmatmul.mubr.bf16.gmra.mrb[0].mxu0 %v50
  %v86 = vpop.f32.mrb[0].mxu0
  %v87 = vadd.f32 %v35, %v86
  %v88 = vpop.f32.mrb[0].mxu0
  %v89 = vpop.f32.mrb[0].mxu0
  %v90 = vadd.f32 %v35, %v89
  %v91 = vpop.f32.mrb[0].mxu0
  %92 = vdwg.mxu0
  %v93 = vmax.f32 %v87, 0.0
  %v94 = vmax.f32 %v90, 0.0
  %v95 = vpack.c.bf16 %v94, %v93
  %v96 = vld [vmem:[%s2] sm:$0xf]
  %v97 = vld [vmem:[%s2 + $0x4] sm:$0xf]
  %v98 = vld [vmem:[%s2 + $0x8] sm:$0xf]
  %v99 = vld [vmem:[%s2 + $0xc] sm:$0xf]
  %v100 = vld [vmem:[%s2 + $0x10] sm:$0xf]
  %v101 = vld [vmem:[%s2 + $0x14] sm:$0xf]
  %v102 = vld [vmem:[%s2 + $0x18] sm:$0xf]
  %v103 = vld [vmem:[%s2 + $0x1c] sm:$0xf]
  %v104 = vld [vmem:[%s2 + $0x20] sm:$0xf]
  %v105 = vld [vmem:[%s2 + $0x24] sm:$0xf]
  %v106 = vld [vmem:[%s2 + $0x28] sm:$0xf]
  %v107 = vld [vmem:[%s2 + $0x2c] sm:$0xf]
  %v108 = vld [vmem:[%s2 + $0x30] sm:$0xf]
  %v109 = vld [vmem:[%s2 + $0x34] sm:$0xf]
  %v110 = vld [vmem:[%s2 + $0x38] sm:$0xf]
  %v111 = vld [vmem:[%s2 + $0x3c] sm:$0xf]
  %v112 = vlaneseq
  %v113 = vshrl.u32 %v112, 7
  %v114 = vsub.s32 1, %v113
  %v115 = vrot.slane %v27, %v114
  %v132 = vunpack.c.l.b16 %v96
  %v133 = vunpack.c.l.b16 %v97
  %v134 = vunpack.c.l.b16 %v98
  %v135 = vunpack.c.l.b16 %v99
  %v136 = vunpack.c.l.b16 %v100
  %v137 = vunpack.c.l.b16 %v101
  %v138 = vunpack.c.l.b16 %v102
  %v139 = vunpack.c.l.b16 %v103
  %v140 = vunpack.c.l.b16 %v104
  %v141 = vunpack.c.l.b16 %v105
  %v142 = vunpack.c.l.b16 %v106
  %v143 = vunpack.c.l.b16 %v107
  %v144 = vunpack.c.l.b16 %v108
  %v145 = vunpack.c.l.b16 %v109
  %v146 = vunpack.c.l.b16 %v110
  %v147 = vunpack.c.l.b16 %v111
  %v148 = vpack.c.b16 %v133, %v132
  %v149 = vpack.c.b16 %v135, %v134
  %v150 = vpack.c.b16 %v137, %v136
  %v151 = vpack.c.b16 %v139, %v138
  %v152 = vpack.c.b16 %v141, %v140
  %v153 = vpack.c.b16 %v143, %v142
  %v154 = vpack.c.b16 %v145, %v144
  %v155 = vpack.c.b16 %v147, %v146
  %164 = vmatprep.subr.bf16.mxu0 0
  %165 = vmatpush1.bf16.msra.mxu0 %v148
  %166 = vmatprep.subr.bf16.mxu0 0
  %167 = vmatpush1.bf16.msra.mxu0 %v149
  %168 = vmatprep.subr.bf16.mxu0 0
  %169 = vmatpush1.bf16.msra.mxu0 %v150
  %170 = vmatprep.subr.bf16.mxu0 0
  %171 = vmatpush1.bf16.msra.mxu0 %v151
  %172 = vmatprep.subr.bf16.mxu0 0
  %173 = vmatpush1.bf16.msra.mxu0 %v152
  %174 = vmatprep.subr.bf16.mxu0 0
  %175 = vmatpush1.bf16.msra.mxu0 %v153
  %176 = vmatprep.subr.bf16.mxu0 0
  %177 = vmatpush1.bf16.msra.mxu0 %v154
  %178 = vmatprep.subr.bf16.mxu0 0
  %179 = vmatpush1.bf16.msra.mxu0 %v155
  %180 = vmatprep.subr.bf16.mxu0 0
  %181 = vmatpush1.bf16.msra.mxu0 0
  %182 = vmatprep.subr.bf16.mxu0 0
  %183 = vmatpush1.bf16.msra.mxu0 0
  %184 = vmatprep.subr.bf16.mxu0 0
  %185 = vmatpush1.bf16.msra.mxu0 0
  %186 = vmatprep.subr.bf16.mxu0 0
  %187 = vmatpush1.bf16.msra.mxu0 0
  %188 = vmatprep.subr.bf16.mxu0 0
  %189 = vmatpush1.bf16.msra.mxu0 0
  %190 = vmatprep.subr.bf16.mxu0 0
  %191 = vmatpush1.bf16.msra.mxu0 0
  %192 = vmatprep.subr.bf16.mxu0 0
  %193 = vmatpush1.bf16.msra.mxu0 0
  %194 = vmatprep.subr.bf16.mxu0 0
  %195 = vmatpush1.bf16.msra.mxu0 0
  %196 = vmatprep.mubr.bf16.mxu0 0
  %197 = vmatmul.mubr.bf16.gmra.mrb[0].mxu0 %v95
  %v198 = vpop.f32.mrb[0].mxu0
  %v199 = vadd.f32 %v115, %v198
  %v200 = vpop.f32.mrb[0].mxu0
  %v201 = vpop.f32.mrb[0].mxu0
  %v202 = vadd.f32 %v115, %v201
  %v203 = vpop.f32.mrb[0].mxu0
  %204 = vdwg.mxu0
  %v205 = vpack.c.bf16 %v202, %v199
  %s206 = scalar_lea.vmem %s2, 64
  %v207 = vld [vmem:[%s206] sm:$0xf]
  %v208 = vld [vmem:[%s206 + $0x4] sm:$0xf]
  %v209 = vld [vmem:[%s206 + $0x8] sm:$0xf]
  %v210 = vld [vmem:[%s206 + $0xc] sm:$0xf]
  %v211 = vld [vmem:[%s206 + $0x10] sm:$0xf]
  %v212 = vld [vmem:[%s206 + $0x14] sm:$0xf]
  %v213 = vld [vmem:[%s206 + $0x18] sm:$0xf]
  %v214 = vld [vmem:[%s206 + $0x1c] sm:$0xf]
  %v215 = vld [vmem:[%s206 + $0x20] sm:$0xf]
  %v216 = vld [vmem:[%s206 + $0x24] sm:$0xf]
  %v217 = vld [vmem:[%s206 + $0x28] sm:$0xf]
  %v218 = vld [vmem:[%s206 + $0x2c] sm:$0xf]
  %v219 = vld [vmem:[%s206 + $0x30] sm:$0xf]
  %v220 = vld [vmem:[%s206 + $0x34] sm:$0xf]
  %v221 = vld [vmem:[%s206 + $0x38] sm:$0xf]
  %v222 = vld [vmem:[%s206 + $0x3c] sm:$0xf]
  %v223 = vlaneseq
  %v224 = vshrl.u32 %v223, 7
  %v225 = vsub.s32 2, %v224
  %v226 = vrot.slane %v27, %v225
  %v243 = vunpack.c.l.b16 %v207
  %v244 = vunpack.c.l.b16 %v208
  %v245 = vunpack.c.l.b16 %v209
  %v246 = vunpack.c.l.b16 %v210
  %v247 = vunpack.c.l.b16 %v211
  %v248 = vunpack.c.l.b16 %v212
  %v249 = vunpack.c.l.b16 %v213
  %v250 = vunpack.c.l.b16 %v214
  %v251 = vunpack.c.l.b16 %v215
  %v252 = vunpack.c.l.b16 %v216
  %v253 = vunpack.c.l.b16 %v217
  %v254 = vunpack.c.l.b16 %v218
  %v255 = vunpack.c.l.b16 %v219
  %v256 = vunpack.c.l.b16 %v220
  %v257 = vunpack.c.l.b16 %v221
  %v258 = vunpack.c.l.b16 %v222
  %v259 = vpack.c.b16 %v244, %v243
  %v260 = vpack.c.b16 %v246, %v245
  %v261 = vpack.c.b16 %v248, %v247
  %v262 = vpack.c.b16 %v250, %v249
  %v263 = vpack.c.b16 %v252, %v251
  %v264 = vpack.c.b16 %v254, %v253
  %v265 = vpack.c.b16 %v256, %v255
  %v266 = vpack.c.b16 %v258, %v257
  %275 = vmatprep.subr.bf16.mxu0 0
  %276 = vmatpush1.bf16.msra.mxu0 %v259
  %277 = vmatprep.subr.bf16.mxu0 0
  %278 = vmatpush1.bf16.msra.mxu0 %v260
  %279 = vmatprep.subr.bf16.mxu0 0
  %280 = vmatpush1.bf16.msra.mxu0 %v261
  %281 = vmatprep.subr.bf16.mxu0 0
  %282 = vmatpush1.bf16.msra.mxu0 %v262
  %283 = vmatprep.subr.bf16.mxu0 0
  %284 = vmatpush1.bf16.msra.mxu0 %v263
  %285 = vmatprep.subr.bf16.mxu0 0
  %286 = vmatpush1.bf16.msra.mxu0 %v264
  %287 = vmatprep.subr.bf16.mxu0 0
  %288 = vmatpush1.bf16.msra.mxu0 %v265
  %289 = vmatprep.subr.bf16.mxu0 0
  %290 = vmatpush1.bf16.msra.mxu0 %v266
  %291 = vmatprep.subr.bf16.mxu0 0
  %292 = vmatpush1.bf16.msra.mxu0 0
  %293 = vmatprep.subr.bf16.mxu0 0
  %294 = vmatpush1.bf16.msra.mxu0 0
  %295 = vmatprep.subr.bf16.mxu0 0
  %296 = vmatpush1.bf16.msra.mxu0 0
  %297 = vmatprep.subr.bf16.mxu0 0
  %298 = vmatpush1.bf16.msra.mxu0 0
  %299 = vmatprep.subr.bf16.mxu0 0
  %300 = vmatpush1.bf16.msra.mxu0 0
  %301 = vmatprep.subr.bf16.mxu0 0
  %302 = vmatpush1.bf16.msra.mxu0 0
  %303 = vmatprep.subr.bf16.mxu0 0
  %304 = vmatpush1.bf16.msra.mxu0 0
  %305 = vmatprep.subr.bf16.mxu0 0
  %306 = vmatpush1.bf16.msra.mxu0 0
  %307 = vmatprep.mubr.bf16.mxu0 0
  %308 = vmatmul.mubr.bf16.gmra.mrb[0].mxu0 %v205
  %v309 = vpop.f32.mrb[0].mxu0
  %v310 = vadd.f32 %v226, %v309
  %v311 = vpop.f32.mrb[0].mxu0
  %v312 = vpop.f32.mrb[0].mxu0
  %v313 = vadd.f32 %v226, %v312
  %v314 = vpop.f32.mrb[0].mxu0
  %315 = vdwg.mxu0
  %v316 = vmax.f32 %v310, 0.0
  %v317 = vmax.f32 %v313, 0.0
  %v318 = vpack.c.bf16 %v317, %v316
  %s319 = scalar_lea.vmem %s2, 128
  %v320 = vld [vmem:[%s319] sm:$0xf]
  %v321 = vld [vmem:[%s319 + $0x4] sm:$0xf]
  %v322 = vld [vmem:[%s319 + $0x8] sm:$0xf]
  %v323 = vld [vmem:[%s319 + $0xc] sm:$0xf]
  %v324 = vld [vmem:[%s319 + $0x10] sm:$0xf]
  %v325 = vld [vmem:[%s319 + $0x14] sm:$0xf]
  %v326 = vld [vmem:[%s319 + $0x18] sm:$0xf]
  %v327 = vld [vmem:[%s319 + $0x1c] sm:$0xf]
  %v328 = vld [vmem:[%s319 + $0x20] sm:$0xf]
  %v329 = vld [vmem:[%s319 + $0x24] sm:$0xf]
  %v330 = vld [vmem:[%s319 + $0x28] sm:$0xf]
  %v331 = vld [vmem:[%s319 + $0x2c] sm:$0xf]
  %v332 = vld [vmem:[%s319 + $0x30] sm:$0xf]
  %v333 = vld [vmem:[%s319 + $0x34] sm:$0xf]
  %v334 = vld [vmem:[%s319 + $0x38] sm:$0xf]
  %v335 = vld [vmem:[%s319 + $0x3c] sm:$0xf]
  %v336 = vlaneseq
  %v337 = vshrl.u32 %v336, 7
  %v338 = vsub.s32 3, %v337
  %v339 = vrot.slane %v27, %v338
  %v356 = vunpack.c.l.b16 %v320
  %v357 = vunpack.c.l.b16 %v321
  %v358 = vunpack.c.l.b16 %v322
  %v359 = vunpack.c.l.b16 %v323
  %v360 = vunpack.c.l.b16 %v324
  %v361 = vunpack.c.l.b16 %v325
  %v362 = vunpack.c.l.b16 %v326
  %v363 = vunpack.c.l.b16 %v327
  %v364 = vunpack.c.l.b16 %v328
  %v365 = vunpack.c.l.b16 %v329
  %v366 = vunpack.c.l.b16 %v330
  %v367 = vunpack.c.l.b16 %v331
  %v368 = vunpack.c.l.b16 %v332
  %v369 = vunpack.c.l.b16 %v333
  %v370 = vunpack.c.l.b16 %v334
  %v371 = vunpack.c.l.b16 %v335
  %v372 = vpack.c.b16 %v357, %v356
  %v373 = vpack.c.b16 %v359, %v358
  %v374 = vpack.c.b16 %v361, %v360
  %v375 = vpack.c.b16 %v363, %v362
  %v376 = vpack.c.b16 %v365, %v364
  %v377 = vpack.c.b16 %v367, %v366
  %v378 = vpack.c.b16 %v369, %v368
  %v379 = vpack.c.b16 %v371, %v370
  %388 = vmatprep.subr.bf16.mxu0 0
  %389 = vmatpush1.bf16.msra.mxu0 %v372
  %390 = vmatprep.subr.bf16.mxu0 0
  %391 = vmatpush1.bf16.msra.mxu0 %v373
  %392 = vmatprep.subr.bf16.mxu0 0
  %393 = vmatpush1.bf16.msra.mxu0 %v374
  %394 = vmatprep.subr.bf16.mxu0 0
  %395 = vmatpush1.bf16.msra.mxu0 %v375
  %396 = vmatprep.subr.bf16.mxu0 0
  %397 = vmatpush1.bf16.msra.mxu0 %v376
  %398 = vmatprep.subr.bf16.mxu0 0
  %399 = vmatpush1.bf16.msra.mxu0 %v377
  %400 = vmatprep.subr.bf16.mxu0 0
  %401 = vmatpush1.bf16.msra.mxu0 %v378
  %402 = vmatprep.subr.bf16.mxu0 0
  %403 = vmatpush1.bf16.msra.mxu0 %v379
  %404 = vmatprep.subr.bf16.mxu0 0
  %405 = vmatpush1.bf16.msra.mxu0 0
  %406 = vmatprep.subr.bf16.mxu0 0
  %407 = vmatpush1.bf16.msra.mxu0 0
  %408 = vmatprep.subr.bf16.mxu0 0
  %409 = vmatpush1.bf16.msra.mxu0 0
  %410 = vmatprep.subr.bf16.mxu0 0
  %411 = vmatpush1.bf16.msra.mxu0 0
  %412 = vmatprep.subr.bf16.mxu0 0
  %413 = vmatpush1.bf16.msra.mxu0 0
  %414 = vmatprep.subr.bf16.mxu0 0
  %415 = vmatpush1.bf16.msra.mxu0 0
  %416 = vmatprep.subr.bf16.mxu0 0
  %417 = vmatpush1.bf16.msra.mxu0 0
  %418 = vmatprep.subr.bf16.mxu0 0
  %419 = vmatpush1.bf16.msra.mxu0 0
  %420 = vmatprep.mubr.bf16.mxu0 0
  %421 = vmatmul.mubr.bf16.gmra.mrb[0].mxu0 %v318
  %v422 = vpop.f32.mrb[0].mxu0
  %v423 = vadd.f32 %v339, %v422
  %v424 = vpop.f32.mrb[0].mxu0
  %v425 = vpop.f32.mrb[0].mxu0
  %v426 = vadd.f32 %v339, %v425
  %v427 = vpop.f32.mrb[0].mxu0
  %428 = vdwg.mxu0
  %v429 = vadd.f32 %v423, %v199
  %v430 = vadd.f32 %v426, %v202
  %v431 = vpack.c.bf16 %v430, %v429
  %s432 = scalar_lea.vmem %s2, 192
  %v433 = vld [vmem:[%s432] sm:$0xf]
  %v434 = vld [vmem:[%s432 + $0x4] sm:$0xf]
  %v435 = vld [vmem:[%s432 + $0x8] sm:$0xf]
  %v436 = vld [vmem:[%s432 + $0xc] sm:$0xf]
  %v437 = vld [vmem:[%s432 + $0x10] sm:$0xf]
  %v438 = vld [vmem:[%s432 + $0x14] sm:$0xf]
  %v439 = vld [vmem:[%s432 + $0x18] sm:$0xf]
  %v440 = vld [vmem:[%s432 + $0x1c] sm:$0xf]
  %v441 = vld [vmem:[%s432 + $0x20] sm:$0xf]
  %v442 = vld [vmem:[%s432 + $0x24] sm:$0xf]
  %v443 = vld [vmem:[%s432 + $0x28] sm:$0xf]
  %v444 = vld [vmem:[%s432 + $0x2c] sm:$0xf]
  %v445 = vld [vmem:[%s432 + $0x30] sm:$0xf]
  %v446 = vld [vmem:[%s432 + $0x34] sm:$0xf]
  %v447 = vld [vmem:[%s432 + $0x38] sm:$0xf]
  %v448 = vld [vmem:[%s432 + $0x3c] sm:$0xf]
  %v449 = vlaneseq
  %v450 = vshrl.u32 %v449, 7
  %v451 = vsub.s32 4, %v450
  %v452 = vrot.slane %v27, %v451
  %v469 = vunpack.c.l.b16 %v433
  %v470 = vunpack.c.l.b16 %v434
  %v471 = vunpack.c.l.b16 %v435
  %v472 = vunpack.c.l.b16 %v436
  %v473 = vunpack.c.l.b16 %v437
  %v474 = vunpack.c.l.b16 %v438
  %v475 = vunpack.c.l.b16 %v439
  %v476 = vunpack.c.l.b16 %v440
  %v477 = vunpack.c.l.b16 %v441
  %v478 = vunpack.c.l.b16 %v442
  %v479 = vunpack.c.l.b16 %v443
  %v480 = vunpack.c.l.b16 %v444
  %v481 = vunpack.c.l.b16 %v445
  %v482 = vunpack.c.l.b16 %v446
  %v483 = vunpack.c.l.b16 %v447
  %v484 = vunpack.c.l.b16 %v448
  %v485 = vpack.c.b16 %v470, %v469
  %v486 = vpack.c.b16 %v472, %v471
  %v487 = vpack.c.b16 %v474, %v473
  %v488 = vpack.c.b16 %v476, %v475
  %v489 = vpack.c.b16 %v478, %v477
  %v490 = vpack.c.b16 %v480, %v479
  %v491 = vpack.c.b16 %v482, %v481
  %v492 = vpack.c.b16 %v484, %v483
  %501 = vmatprep.subr.bf16.mxu0 0
  %502 = vmatpush1.bf16.msra.mxu0 %v485
  %503 = vmatprep.subr.bf16.mxu0 0
  %504 = vmatpush1.bf16.msra.mxu0 %v486
  %505 = vmatprep.subr.bf16.mxu0 0
  %506 = vmatpush1.bf16.msra.mxu0 %v487
  %507 = vmatprep.subr.bf16.mxu0 0
  %508 = vmatpush1.bf16.msra.mxu0 %v488
  %509 = vmatprep.subr.bf16.mxu0 0
  %510 = vmatpush1.bf16.msra.mxu0 %v489
  %511 = vmatprep.subr.bf16.mxu0 0
  %512 = vmatpush1.bf16.msra.mxu0 %v490
  %513 = vmatprep.subr.bf16.mxu0 0
  %514 = vmatpush1.bf16.msra.mxu0 %v491
  %515 = vmatprep.subr.bf16.mxu0 0
  %516 = vmatpush1.bf16.msra.mxu0 %v492
  %517 = vmatprep.subr.bf16.mxu0 0
  %518 = vmatpush1.bf16.msra.mxu0 0
  %519 = vmatprep.subr.bf16.mxu0 0
  %520 = vmatpush1.bf16.msra.mxu0 0
  %521 = vmatprep.subr.bf16.mxu0 0
  %522 = vmatpush1.bf16.msra.mxu0 0
  %523 = vmatprep.subr.bf16.mxu0 0
  %524 = vmatpush1.bf16.msra.mxu0 0
  %525 = vmatprep.subr.bf16.mxu0 0
  %526 = vmatpush1.bf16.msra.mxu0 0
  %527 = vmatprep.subr.bf16.mxu0 0
  %528 = vmatpush1.bf16.msra.mxu0 0
  %529 = vmatprep.subr.bf16.mxu0 0
  %530 = vmatpush1.bf16.msra.mxu0 0
  %531 = vmatprep.subr.bf16.mxu0 0
  %532 = vmatpush1.bf16.msra.mxu0 0
  %533 = vmatprep.mubr.bf16.mxu0 0
  %534 = vmatmul.mubr.bf16.gmra.mrb[0].mxu0 %v431
  %v535 = vpop.f32.mrb[0].mxu0
  %v536 = vadd.f32 %v452, %v535
  %v537 = vpop.f32.mrb[0].mxu0
  %v538 = vpop.f32.mrb[0].mxu0
  %v539 = vadd.f32 %v452, %v538
  %v540 = vpop.f32.mrb[0].mxu0
  %541 = vdwg.mxu0
  %v542 = vmax.f32 %v536, 0.0
  %v543 = vmax.f32 %v539, 0.0
  %v544 = vpack.c.bf16 %v543, %v542
  %v545 = vld [vmem:[%s3] sm:$0xf]
  %v546 = vld [vmem:[%s3 + $0x4] sm:$0xf]
  %v547 = vld [vmem:[%s3 + $0x8] sm:$0xf]
  %v548 = vld [vmem:[%s3 + $0xc] sm:$0xf]
  %v549 = vld [vmem:[%s3 + $0x10] sm:$0xf]
  %v550 = vld [vmem:[%s3 + $0x14] sm:$0xf]
  %v551 = vld [vmem:[%s3 + $0x18] sm:$0xf]
  %v552 = vld [vmem:[%s3 + $0x1c] sm:$0xf]
  %v553 = vld [vmem:[%s3 + $0x20] sm:$0xf]
  %v554 = vld [vmem:[%s3 + $0x24] sm:$0xf]
  %v555 = vld [vmem:[%s3 + $0x28] sm:$0xf]
  %v556 = vld [vmem:[%s3 + $0x2c] sm:$0xf]
  %v557 = vld [vmem:[%s3 + $0x30] sm:$0xf]
  %v558 = vld [vmem:[%s3 + $0x34] sm:$0xf]
  %v559 = vld [vmem:[%s3 + $0x38] sm:$0xf]
  %v560 = vld [vmem:[%s3 + $0x3c] sm:$0xf]
  %v561 = vld [vmem:[%s5] sm:$0x1]
  %v563 = vlaneseq
  %v564 = vshrl.u32 %v563, 7
  %v565 = vsub.s32 0, %v564
  %v566 = vrot.slane %v561, %v565
  %v584 = vunpack.c.l.b16 %v545
  %v585 = vunpack.c.l.b16 %v546
  %v586 = vunpack.c.l.b16 %v547
  %v587 = vunpack.c.l.b16 %v548
  %v588 = vunpack.c.l.b16 %v549
  %v589 = vunpack.c.l.b16 %v550
  %v590 = vunpack.c.l.b16 %v551
  %v591 = vunpack.c.l.b16 %v552
  %v592 = vunpack.c.l.b16 %v553
  %v593 = vunpack.c.l.b16 %v554
  %v594 = vunpack.c.l.b16 %v555
  %v595 = vunpack.c.l.b16 %v556
  %v596 = vunpack.c.l.b16 %v557
  %v597 = vunpack.c.l.b16 %v558
  %v598 = vunpack.c.l.b16 %v559
  %v599 = vunpack.c.l.b16 %v560
  %v600 = vpack.c.b16 %v585, %v584
  %v601 = vpack.c.b16 %v587, %v586
  %v602 = vpack.c.b16 %v589, %v588
  %v603 = vpack.c.b16 %v591, %v590
  %v604 = vpack.c.b16 %v593, %v592
  %v605 = vpack.c.b16 %v595, %v594
  %v606 = vpack.c.b16 %v597, %v596
  %v607 = vpack.c.b16 %v599, %v598
  %616 = vmatprep.subr.bf16.mxu0 0
  %617 = vmatpush1.bf16.msra.mxu0 %v600
  %618 = vmatprep.subr.bf16.mxu0 0
  %619 = vmatpush1.bf16.msra.mxu0 %v601
  %620 = vmatprep.subr.bf16.mxu0 0
  %621 = vmatpush1.bf16.msra.mxu0 %v602
  %622 = vmatprep.subr.bf16.mxu0 0
  %623 = vmatpush1.bf16.msra.mxu0 %v603
  %624 = vmatprep.subr.bf16.mxu0 0
  %625 = vmatpush1.bf16.msra.mxu0 %v604
  %626 = vmatprep.subr.bf16.mxu0 0
  %627 = vmatpush1.bf16.msra.mxu0 %v605
  %628 = vmatprep.subr.bf16.mxu0 0
  %629 = vmatpush1.bf16.msra.mxu0 %v606
  %630 = vmatprep.subr.bf16.mxu0 0
  %631 = vmatpush1.bf16.msra.mxu0 %v607
  %632 = vmatprep.subr.bf16.mxu0 0
  %633 = vmatpush1.bf16.msra.mxu0 0
  %634 = vmatprep.subr.bf16.mxu0 0
  %635 = vmatpush1.bf16.msra.mxu0 0
  %636 = vmatprep.subr.bf16.mxu0 0
  %637 = vmatpush1.bf16.msra.mxu0 0
  %638 = vmatprep.subr.bf16.mxu0 0
  %639 = vmatpush1.bf16.msra.mxu0 0
  %640 = vmatprep.subr.bf16.mxu0 0
  %641 = vmatpush1.bf16.msra.mxu0 0
  %642 = vmatprep.subr.bf16.mxu0 0
  %643 = vmatpush1.bf16.msra.mxu0 0
  %644 = vmatprep.subr.bf16.mxu0 0
  %645 = vmatpush1.bf16.msra.mxu0 0
  %646 = vmatprep.subr.bf16.mxu0 0
  %647 = vmatpush1.bf16.msra.mxu0 0
  %648 = vmatprep.mubr.bf16.mxu0 0
  %649 = vmatmul.mubr.bf16.gmra.mrb[0].mxu0 %v544
  %v650 = vpop.f32.mrb[0].mxu0
  %v651 = vadd.f32 %v566, %v650
  %v652 = vpop.f32.mrb[0].mxu0
  %v653 = vpop.f32.mrb[0].mxu0
  %v654 = vadd.f32 %v566, %v653
  %v655 = vpop.f32.mrb[0].mxu0
  %656 = vdwg.mxu0
  %v657 = vmax.f32 %v651, 0.0
  %v658 = vmax.f32 %v654, 0.0
  %vm659 = vcmask 64512
  %660 = vst.msk [vmem:[%s6] sm:$0xff] %vm659, %v657
  %661 = vst.msk [vmem:[%s6 + $0x8] sm:$0xff] %vm659, %v658
  // Predicated region
  $region26: #{solar_forward.1} parent=0 // pred_check
    _
  $region27: #{solar_forward.1} parent=0 // pred_check_branch
    %663 = sbr.rel (0) target = $region29
  $region28: #{solar_forward.1} parent=0 // pred_region
    _
  $region29: #{solar_forward.1} parent=0 // pred_fallthru
    _
  // Predicated region
  $region30: #{solar_forward.1} parent=0 // pred_check
    _
  $region31: #{solar_forward.1} parent=0 // pred_check_branch
    %665 = sbr.rel (0) target = $region33
  $region32: #{solar_forward.1} parent=0 // pred_region
    _
  $region33: #{solar_forward.1} parent=0 // pred_fallthru
    _

</llo_original>
